<compile_context>
chip_gen: v7x
topology: tpu7x:2x2x1
jax: 0.10.0
libtpu: 0.0.40
codegen_flags: <defaults>
</compile_context>

<pallas_src>
import functools

import jax
import jax.numpy as jnp
from jax.experimental import pallas as pl
from jax.experimental.pallas import tpu as pltpu


# ----------------------------------------------------------------------------
# Helpers
# ----------------------------------------------------------------------------
def _build_patches(x, k, pad, pool, kpad):
    """im2col for the 3x3 conv, laid out (pool_phase q, Kpad, N*Ho*Wo).

    K index = ci*k*k + kh*k + kw ; column index = n*Ho*Wo + yo*Wo + xo where
    the full-res position is (y, x) = (yo*pool + dy, xo*pool + dx) and the
    leading pool-phase axis is q = dy*pool + dx.  Row K (first pad row) is set
    to 1.0 so the conv1 BN shift can ride inside the matmul.
    """
    N, C, H, W = x.shape
    xp = jnp.pad(x, ((0, 0), (0, 0), (pad, pad), (pad, pad)))
    views = [xp[:, :, kh:kh + H, kw:kw + W] for kh in range(k) for kw in range(k)]
    v = jnp.stack(views, axis=0)                         # (kk, n, ci, y, x)
    Ho, Wo = H // pool, W // pool
    v = v.reshape(k * k, N, C, Ho, pool, Wo, pool)       # (kk, n, ci, yo, dy, xo, dx)
    v = v.transpose(4, 6, 2, 0, 1, 3, 5)                 # (dy, dx, ci, kk, n, yo, xo)
    K = C * k * k
    m2 = N * Ho * Wo
    p = v.reshape(pool * pool, K, m2)
    p = jnp.pad(p, ((0, 0), (0, kpad - K), (0, 0)))
    p = p.at[:, K, :].set(1.0)                           # constant-1 bias row
    return p.astype(jnp.bfloat16)


def _pick_tile(m2, target=512):
    """Largest lane tile <= target that is a multiple of 128 and divides m2."""
    if m2 % 128 != 0:
        return m2                                        # single full-extent block
    t = (min(target, m2) // 128) * 128
    while m2 % t != 0:
        t -= 128
    return t


def _supports_bf16_valu():
    try:
        kind = jax.devices()[0].device_kind.lower()
    except Exception:
        return False
    return ("v6" in kind) or ("v7" in kind)


# ----------------------------------------------------------------------------
# Fused Pallas kernel: entire Darknet forward per M-tile
# ----------------------------------------------------------------------------
def _darknet_fused_kernel(p_ref, w1_ref, w2_ref, b2_ref, w3_ref, b3_ref,
                          aw_ref, ah_ref, o_ref, *,
                          stride, leaky1, leaky2, leaky3, pool_sq,
                          wo_bits, wo_mask, ho_mask, bf16_epi):
    f32 = jnp.float32
    act_dt = jnp.bfloat16 if bf16_epi else f32

    w1 = w1_ref[...]
    w2 = w2_ref[...]
    b2 = b2_ref[...]

    pooled = None
    for q in range(pool_sq):                       # 4 pool phases, statically unrolled
        # conv1 (3x3) + BN (scale folded into weights, shift rides the bias row)
        a1 = jnp.dot(w1, p_ref[q], preferred_element_type=f32)
        if leaky1:
            a1 = jnp.maximum(a1, 0.1 * a1)
        a1 = a1.astype(act_dt)

        # conv2 (1x1) with the shortcut(from=-2) add fused into its epilogue
        a2 = jnp.dot(w2, a1.astype(jnp.bfloat16), preferred_element_type=f32) + b2
        if leaky2:
            a2 = jnp.maximum(a2, 0.1 * a2)
        a3 = a2.astype(act_dt) + a1

        # maxpool 2x2 stride 2 == running max over the pool-phase axis
        pooled = a3 if pooled is None else jnp.maximum(pooled, a3)

    # conv3 (1x1), rows pre-permuted to attribute-major / anchor-padded-to-8 layout
    y = jnp.dot(w3_ref[...], pooled.astype(jnp.bfloat16),
                preferred_element_type=f32) + b3_ref[...]
    if leaky3:
        y = jnp.maximum(y, 0.1 * y)

    tm = y.shape[1]

    # sigmoid via EUP exp + approximate reciprocal
    def sig(v):
        return pl.reciprocal(1.0 + jnp.exp(-v), approx=True)

    # YOLO head -- grid offsets from an in-kernel lane iota
    # global column = n*Ho*Wo + gy*Wo + gx  (Ho, Wo powers of two)
    lane = (jax.lax.broadcasted_iota(jnp.int32, (8, tm), 1)
            + pl.program_id(0) * tm)
    gx = jnp.bitwise_and(lane, wo_mask).astype(f32)
    gy = jnp.bitwise_and(jnp.right_shift(lane, wo_bits), ho_mask).astype(f32)

    bx = (sig(y[0:8]) + gx) * stride               # attr 0: x
    by = (sig(y[8:16]) + gy) * stride              # attr 1: y
    bw = jnp.exp(y[16:24]) * aw_ref[...]           # attr 2: exp(tw)*anchor_w (stride cancels)
    bh = jnp.exp(y[24:32]) * ah_ref[...]           # attr 3: exp(th)*anchor_h
    pc = sig(y[32:])                               # objectness + class scores

    # 8-sublane-aligned, 128-lane-dense stores
    o_ref[0:8, :] = bx
    o_ref[8:16, :] = by
    o_ref[16:24, :] = bw
    o_ref[24:32, :] = bh
    o_ref[32:, :] = pc


@functools.partial(jax.jit, static_argnames=("k", "pad", "pool", "leaky1", "leaky2",
                                             "leaky3", "num_anchors", "num_classes",
                                             "bf16_epi"))
def _fused_forward(x, params, *, k, pad, pool, leaky1, leaky2, leaky3,
                   num_anchors, num_classes, bf16_epi):
    N, C, H, W = x.shape
    Ho, Wo = H // pool, W // pool
    assert (Wo & (Wo - 1)) == 0 and (Ho & (Ho - 1)) == 0, "fused head expects pow2 grid"
    # TODO(synk): non-pow2 grids (e.g. 13x13 at 416) need a div/mod gx/gy derivation.
    stride = H // Ho                       # img_dim // grid_size
    attrs = num_classes + 5
    pool_sq = pool * pool
    m2 = N * Ho * Wo
    kpad = params['w1'].shape[1]

    patches = _build_patches(x, k, pad, pool, kpad)     # (pool_sq, Kpad, m2) bf16

    tile_m = _pick_tile(m2)
    grid = (m2 // tile_m,)

    kernel = functools.partial(
        _darknet_fused_kernel,
        stride=float(stride), leaky1=leaky1, leaky2=leaky2, leaky3=leaky3,
        pool_sq=pool_sq,
        wo_bits=int(Wo).bit_length() - 1, wo_mask=Wo - 1, ho_mask=Ho - 1,
        bf16_epi=bf16_epi)

    def _resident(shape):
        nd = len(shape)
        return pl.BlockSpec(tuple(int(s) for s in shape), lambda i, _nd=nd: (0,) * _nd)

    # Explicit VMEM budget (double-buffered tiles + resident weights + headroom).
    patch_blk = 2 * pool_sq * kpad * tile_m * 2
    out_blk = 2 * attrs * 8 * tile_m * 4
    wbytes = sum(int(v.size) * v.dtype.itemsize for v in params.values())
    vmem_limit = min(int(patch_blk + out_blk + 2 * wbytes) + (8 << 20), 48 << 20)

    out = pl.pallas_call(
        kernel,
        out_shape=jax.ShapeDtypeStruct((attrs * 8, m2), jnp.float32),
        grid=grid,
        in_specs=[pl.BlockSpec((pool_sq, kpad, tile_m), lambda i: (0, 0, i)),
                  _resident(params['w1'].shape),
                  _resident(params['w2'].shape), _resident(params['b2'].shape),
                  _resident(params['w3'].shape), _resident(params['b3'].shape),
                  _resident(params['aw'].shape), _resident(params['ah'].shape)],
        out_specs=pl.BlockSpec((attrs * 8, tile_m), lambda i: (0, i)),
        compiler_params=pltpu.CompilerParams(
            dimension_semantics=("parallel",),
            vmem_limit_bytes=vmem_limit),
    )(patches, params['w1'], params['w2'], params['b2'],
      params['w3'], params['b3'], params['aw'], params['ah'])

    # Model-boundary reorder to PyTorch's (N, A*g*g, 5+C) output layout.
    # (Kept outside the hot path; the in-kernel output stays lane-dense.)
    o = out.reshape(attrs, 8, N, Ho, Wo)[:, :num_anchors]   # (attr, a, n, gy, gx)
    o = jnp.transpose(o, (2, 1, 3, 4, 0)).reshape(N, num_anchors * Ho * Wo, attrs)
    return o


# ----------------------------------------------------------------------------
# Darknet module (synthetic config, deterministic params)
# ----------------------------------------------------------------------------
# In-script equivalent of a parsed .cfg (parse_cfg output). The 'bacth_normalize'
# typo is intentional -- it mirrors create_modules().
MODULE_DEFS = [
    {'type': 'net', 'channels': '4', 'height': '16', 'width': '16'},
    {'type': 'convolutional', 'bacth_normalize': '1', 'filters': '8', 'size': '3',
     'stride': '1', 'activation': 'leaky'},
    {'type': 'convolutional', 'filters': '8', 'size': '1', 'stride': '1',
     'activation': 'leaky'},
    {'type': 'shortcut', 'from': '-2', 'activation': 'linear'},
    {'type': 'maxpool', 'size': '2', 'stride': '2'},
    {'type': 'convolutional', 'filters': '27', 'size': '1', 'stride': '1',
     'activation': 'linear'},  # 27 = 3 anchors * (5 + 4 classes)
    {'type': 'yolo', 'mask': '0,1,2', 'anchors': '10,13,16,30,33,23', 'classes': '4'},
]


class DarknetPallas:
    def __init__(self, module_defs, key):
        self.module_defs = module_defs
        self.net_info = module_defs[0]
        self.img_size = int(self.net_info['height'])
        self.bf16_epi = _supports_bf16_valu()      # bf16 VALU epilogue on v6e/v7x only

        out_filters = [int(self.net_info['channels'])]
        convs, layer_types = [], []
        self.pool = self.pool_stride = None
        self.shortcut_from = None
        self.anchors, self.num_classes = None, None

        for mdef in module_defs[1:]:
            t = mdef['type']
            layer_types.append(t)
            if t == 'convolutional':
                bn = int(mdef.get('bacth_normalize', 0)) != 0
                prev = out_filters[-1]
                filters = int(mdef['filters'])
                k = int(mdef['size'])
                stride = int(mdef['stride'])
                pad = (k - 1) // 2
                key, kw, kb, kg, kbeta, km, kv = jax.random.split(key, 7)
                weight = 0.1 * jax.random.normal(kw, (filters, prev, k, k), jnp.float32)
                if bn:
                    gamma = 1.0 + 0.1 * jax.random.normal(kg, (filters,), jnp.float32)
                    beta = 0.1 * jax.random.normal(kbeta, (filters,), jnp.float32)
                    r_mean = 0.1 * jax.random.normal(km, (filters,), jnp.float32)
                    r_var = jax.random.uniform(kv, (filters,), jnp.float32, 0.5, 1.5)
                    scale = gamma / jnp.sqrt(r_var + 1e-5)
                    shift = beta - r_mean * scale
                else:
                    bias = 0.1 * jax.random.normal(kb, (filters,), jnp.float32)
                    scale = jnp.ones((filters,), jnp.float32)
                    shift = bias
                convs.append(dict(weight=weight, scale=scale, shift=shift,
                                  k=k, stride=stride, pad=pad,
                                  leaky=(mdef['activation'] == 'leaky'),
                                  cout=filters, cin=prev))
                out_filters.append(filters)
            elif t == 'maxpool':
                self.pool = int(mdef['size'])
                self.pool_stride = int(mdef['stride'])
                out_filters.append(out_filters[-1])
            elif t == 'shortcut':
                self.shortcut_from = int(mdef['from'])
                out_filters.append(out_filters[1:][int(mdef['from'])])
            elif t == 'yolo':
                mask = [int(a) for a in mdef['mask'].split(',')]
                anc = [int(a) for a in mdef['anchors'].split(',')]
                anc = [(anc[i], anc[i + 1]) for i in range(0, len(anc), 2)]
                self.anchors = [anc[i] for i in mask]
                self.num_classes = int(mdef['classes'])
                out_filters.append(out_filters[-1])
            else:
                # TODO(synk): 'route' / 'upsample' layers are not exercised by this
                # config; a general cfg would need the per-layer (unfused) path.
                out_filters.append(out_filters[-1])

        # The fused kernel is specialized to this topology (the one in MODULE_DEFS).
        assert layer_types == ['convolutional', 'convolutional', 'shortcut',
                               'maxpool', 'convolutional', 'yolo'], layer_types
        assert convs[0]['k'] == 3 and convs[1]['k'] == 1 and convs[2]['k'] == 1
        assert all(c['stride'] == 1 for c in convs)
        assert self.pool == 2 and self.pool_stride == 2
        assert self.shortcut_from == -2

        c1, c2, c3 = convs
        self.conv_meta = (c1, c2, c3)
        A = len(self.anchors)
        attrs = self.num_classes + 5
        assert c3['cout'] == A * attrs

        # --- fused parameter bundle --------------------------------------------
        # conv1: BN scale folded into weights, BN shift folded into the matmul via
        # the constant-1 patch row at column K1; K padded to a multiple of 128.
        K1 = c1['cin'] * c1['k'] * c1['k']
        Kpad = ((K1 + 1 + 127) // 128) * 128        # room for the bias row
        w1 = (c1['weight'] * c1['scale'][:, None, None, None]).reshape(c1['cout'], K1)
        w1f = jnp.zeros((c1['cout'], Kpad), jnp.float32)
        w1f = w1f.at[:, :K1].set(w1).at[:, K1].set(c1['shift'])
        w1k = w1f.astype(jnp.bfloat16)

        w2 = (c2['weight'] * c2['scale'][:, None, None, None]
              ).reshape(c2['cout'], c2['cin']).astype(jnp.bfloat16)
        b2 = c2['shift'].reshape(-1, 1).astype(jnp.float32)

        # conv3 rows permuted to attribute-major, anchors padded to 8 sublanes
        w3 = (c3['weight'] * c3['scale'][:, None, None, None]
              ).reshape(c3['cout'], c3['cin'])
        w3 = w3.reshape(A, attrs, c3['cin']).transpose(1, 0, 2)          # (attr, a, ci)
        w3k = jnp.zeros((attrs, 8, c3['cin']), jnp.float32).at[:, :A, :].set(w3)
        w3k = w3k.reshape(attrs * 8, c3['cin']).astype(jnp.bfloat16)
        b3 = c3['shift'].reshape(A, attrs).T                             # (attr, a)
        b3k = jnp.zeros((attrs, 8), jnp.float32).at[:, :A].set(b3).reshape(attrs * 8, 1)

        aw = jnp.zeros((8, 1), jnp.float32).at[:A, 0].set(
            jnp.array([a[0] for a in self.anchors], jnp.float32))
        ah = jnp.zeros((8, 1), jnp.float32).at[:A, 0].set(
            jnp.array([a[1] for a in self.anchors], jnp.float32))

        self.params = dict(w1=w1k, w2=w2, b2=b2, w3=w3k, b3=b3k, aw=aw, ah=ah)

    def forward(self, x):
        c1, c2, c3 = self.conv_meta
        yolo_out = _fused_forward(
            x, self.params,
            k=c1['k'], pad=c1['pad'], pool=self.pool,
            leaky1=c1['leaky'], leaky2=c2['leaky'], leaky3=c3['leaky'],
            num_anchors=len(self.anchors), num_classes=self.num_classes,
            bf16_epi=self.bf16_epi)
        return jnp.concatenate([yolo_out], axis=1)


# ----------------------------------------------------------------------------
# Main
# ----------------------------------------------------------------------------
if __name__ == "__main__":
    key = jax.random.PRNGKey(0)
    key, xkey, pkey = jax.random.split(key, 3)

    # batch=2, channels=4, spatial=16x16 (consistent with net_info above)
    x = jax.random.normal(xkey, (2, 4, 16, 16), jnp.float32)

    model = DarknetPallas(MODULE_DEFS, pkey)
    out = model.forward(x)
    out = jax.block_until_ready(out)

    # grid = 16/2 = 8 ; 3 anchors * 8*8 = 192 predictions ; 5 + 4 classes = 9 attrs
    assert out.shape == (2, 192, 9), out.shape
    assert bool(jnp.all(jnp.isfinite(out)))
    print("KERNEL_OK")
</pallas_src>

<mosaic_0001>
module attributes {stable_mosaic.version = 11 : i64} {
  func.func @_darknet_fused_kernel(%arg0: i32, %arg1: memref<4x128x128xbf16, #tpu.memory_space<vmem>>, %arg2: memref<8x128xbf16, #tpu.memory_space<vmem>>, %arg3: memref<8x8xbf16, #tpu.memory_space<vmem>>, %arg4: memref<8x1xf32, #tpu.memory_space<vmem>>, %arg5: memref<72x8xbf16, #tpu.memory_space<vmem>>, %arg6: memref<72x1xf32, #tpu.memory_space<vmem>>, %arg7: memref<8x1xf32, #tpu.memory_space<vmem>>, %arg8: memref<8x1xf32, #tpu.memory_space<vmem>>, %arg9: memref<72x128xf32, #tpu.memory_space<vmem>>) attributes {dimension_semantics = [#tpu.dimension_semantics<parallel>], iteration_bounds = array<i64: 1>, scalar_prefetch = 0 : i64, scratch_operands = 0 : i64, tpu.core_type = #tpu.core_type<tc>, window_params = [{transform_indices = @transform_0, window_bounds = array<i64: 4, 128, 128>}, {pipeline_mode = #tpu.pipeline_mode<synchronous>, transform_indices = @transform_1, window_bounds = array<i64: 8, 128>}, {pipeline_mode = #tpu.pipeline_mode<synchronous>, transform_indices = @transform_2, window_bounds = array<i64: 8, 8>}, {pipeline_mode = #tpu.pipeline_mode<synchronous>, transform_indices = @transform_3, window_bounds = array<i64: 8, 1>}, {pipeline_mode = #tpu.pipeline_mode<synchronous>, transform_indices = @transform_4, window_bounds = array<i64: 72, 8>}, {pipeline_mode = #tpu.pipeline_mode<synchronous>, transform_indices = @transform_5, window_bounds = array<i64: 72, 1>}, {pipeline_mode = #tpu.pipeline_mode<synchronous>, transform_indices = @transform_6, window_bounds = array<i64: 8, 1>}, {pipeline_mode = #tpu.pipeline_mode<synchronous>, transform_indices = @transform_7, window_bounds = array<i64: 8, 1>}, {transform_indices = @transform_8, window_bounds = array<i64: 72, 128>}]} {
    %c0 = arith.constant 0 : index
    %c0_0 = arith.constant 0 : index
    %0 = vector.load %arg2[%c0, %c0_0] : memref<8x128xbf16, #tpu.memory_space<vmem>>, vector<8x128xbf16>
    %c0_1 = arith.constant 0 : index
    %c0_2 = arith.constant 0 : index
    %1 = vector.load %arg3[%c0_1, %c0_2] : memref<8x8xbf16, #tpu.memory_space<vmem>>, vector<8x8xbf16>
    %c0_3 = arith.constant 0 : index
    %c0_4 = arith.constant 0 : index
    %2 = vector.load %arg4[%c0_3, %c0_4] : memref<8x1xf32, #tpu.memory_space<vmem>>, vector<8x1xf32>
    %c0_5 = arith.constant 0 : index
    %c0_6 = arith.constant 0 : index
    %c0_7 = arith.constant 0 : index
    %3 = vector.load %arg1[%c0_5, %c0_6, %c0_7] : memref<4x128x128xbf16, #tpu.memory_space<vmem>>, vector<1x128x128xbf16>
    %4 = vector.shape_cast %3 : vector<1x128x128xbf16> to vector<128x128xbf16>
    %cst = arith.constant dense<0.000000e+00> : vector<8x128xf32>
    %5 = tpu.matmul %0, %4, %cst {dimension_numbers = #tpu.dot_dimension_numbers<[1], [0], [0], [1], [0, 0, 1, 1], [], []>} : vector<8x128xbf16>, vector<128x128xbf16>, vector<8x128xf32> -> vector<8x128xf32>
    %cst_8 = arith.constant 1.000000e-01 : f32
    %6 = vector.broadcast %cst_8 : f32 to vector<8x128xf32>
    %7 = arith.mulf %6, %5 : vector<8x128xf32>
    %8 = arith.maximumf %5, %7 : vector<8x128xf32>
    %9 = arith.truncf %8 : vector<8x128xf32> to vector<8x128xbf16>
    %cst_9 = arith.constant dense<0.000000e+00> : vector<8x128xf32>
    %10 = tpu.matmul %1, %9, %cst_9 {dimension_numbers = #tpu.dot_dimension_numbers<[1], [0], [0], [1], [0, 0, 1, 1], [], []>} : vector<8x8xbf16>, vector<8x128xbf16>, vector<8x128xf32> -> vector<8x128xf32>
    %11 = vector.broadcast %2 : vector<8x1xf32> to vector<8x128xf32>
    %12 = arith.addf %10, %11 : vector<8x128xf32>
    %cst_10 = arith.constant 1.000000e-01 : f32
    %13 = vector.broadcast %cst_10 : f32 to vector<8x128xf32>
    %14 = arith.mulf %13, %12 : vector<8x128xf32>
    %15 = arith.maximumf %12, %14 : vector<8x128xf32>
    %16 = arith.addf %15, %8 : vector<8x128xf32>
    %c1 = arith.constant 1 : index
    %c0_11 = arith.constant 0 : index
    %c0_12 = arith.constant 0 : index
    %17 = vector.load %arg1[%c1, %c0_11, %c0_12] : memref<4x128x128xbf16, #tpu.memory_space<vmem>>, vector<1x128x128xbf16>
    %18 = vector.shape_cast %17 : vector<1x128x128xbf16> to vector<128x128xbf16>
    %cst_13 = arith.constant dense<0.000000e+00> : vector<8x128xf32>
    %19 = tpu.matmul %0, %18, %cst_13 {dimension_numbers = #tpu.dot_dimension_numbers<[1], [0], [0], [1], [0, 0, 1, 1], [], []>} : vector<8x128xbf16>, vector<128x128xbf16>, vector<8x128xf32> -> vector<8x128xf32>
    %cst_14 = arith.constant 1.000000e-01 : f32
    %20 = vector.broadcast %cst_14 : f32 to vector<8x128xf32>
    %21 = arith.mulf %20, %19 : vector<8x128xf32>
    %22 = arith.maximumf %19, %21 : vector<8x128xf32>
    %23 = arith.truncf %22 : vector<8x128xf32> to vector<8x128xbf16>
    %cst_15 = arith.constant dense<0.000000e+00> : vector<8x128xf32>
    %24 = tpu.matmul %1, %23, %cst_15 {dimension_numbers = #tpu.dot_dimension_numbers<[1], [0], [0], [1], [0, 0, 1, 1], [], []>} : vector<8x8xbf16>, vector<8x128xbf16>, vector<8x128xf32> -> vector<8x128xf32>
    %25 = vector.broadcast %2 : vector<8x1xf32> to vector<8x128xf32>
    %26 = arith.addf %24, %25 : vector<8x128xf32>
    %cst_16 = arith.constant 1.000000e-01 : f32
    %27 = vector.broadcast %cst_16 : f32 to vector<8x128xf32>
    %28 = arith.mulf %27, %26 : vector<8x128xf32>
    %29 = arith.maximumf %26, %28 : vector<8x128xf32>
    %30 = arith.addf %29, %22 : vector<8x128xf32>
    %31 = arith.maximumf %16, %30 : vector<8x128xf32>
    %c2 = arith.constant 2 : index
    %c0_17 = arith.constant 0 : index
    %c0_18 = arith.constant 0 : index
    %32 = vector.load %arg1[%c2, %c0_17, %c0_18] : memref<4x128x128xbf16, #tpu.memory_space<vmem>>, vector<1x128x128xbf16>
    %33 = vector.shape_cast %32 : vector<1x128x128xbf16> to vector<128x128xbf16>
    %cst_19 = arith.constant dense<0.000000e+00> : vector<8x128xf32>
    %34 = tpu.matmul %0, %33, %cst_19 {dimension_numbers = #tpu.dot_dimension_numbers<[1], [0], [0], [1], [0, 0, 1, 1], [], []>} : vector<8x128xbf16>, vector<128x128xbf16>, vector<8x128xf32> -> vector<8x128xf32>
    %cst_20 = arith.constant 1.000000e-01 : f32
    %35 = vector.broadcast %cst_20 : f32 to vector<8x128xf32>
    %36 = arith.mulf %35, %34 : vector<8x128xf32>
    %37 = arith.maximumf %34, %36 : vector<8x128xf32>
    %38 = arith.truncf %37 : vector<8x128xf32> to vector<8x128xbf16>
    %cst_21 = arith.constant dense<0.000000e+00> : vector<8x128xf32>
    %39 = tpu.matmul %1, %38, %cst_21 {dimension_numbers = #tpu.dot_dimension_numbers<[1], [0], [0], [1], [0, 0, 1, 1], [], []>} : vector<8x8xbf16>, vector<8x128xbf16>, vector<8x128xf32> -> vector<8x128xf32>
    %40 = vector.broadcast %2 : vector<8x1xf32> to vector<8x128xf32>
    %41 = arith.addf %39, %40 : vector<8x128xf32>
    %cst_22 = arith.constant 1.000000e-01 : f32
    %42 = vector.broadcast %cst_22 : f32 to vector<8x128xf32>
    %43 = arith.mulf %42, %41 : vector<8x128xf32>
    %44 = arith.maximumf %41, %43 : vector<8x128xf32>
    %45 = arith.addf %44, %37 : vector<8x128xf32>
    %46 = arith.maximumf %31, %45 : vector<8x128xf32>
    %c3 = arith.constant 3 : index
    %c0_23 = arith.constant 0 : index
    %c0_24 = arith.constant 0 : index
    %47 = vector.load %arg1[%c3, %c0_23, %c0_24] : memref<4x128x128xbf16, #tpu.memory_space<vmem>>, vector<1x128x128xbf16>
    %48 = vector.shape_cast %47 : vector<1x128x128xbf16> to vector<128x128xbf16>
    %cst_25 = arith.constant dense<0.000000e+00> : vector<8x128xf32>
    %49 = tpu.matmul %0, %48, %cst_25 {dimension_numbers = #tpu.dot_dimension_numbers<[1], [0], [0], [1], [0, 0, 1, 1], [], []>} : vector<8x128xbf16>, vector<128x128xbf16>, vector<8x128xf32> -> vector<8x128xf32>
    %cst_26 = arith.constant 1.000000e-01 : f32
    %50 = vector.broadcast %cst_26 : f32 to vector<8x128xf32>
    %51 = arith.mulf %50, %49 : vector<8x128xf32>
    %52 = arith.maximumf %49, %51 : vector<8x128xf32>
    %53 = arith.truncf %52 : vector<8x128xf32> to vector<8x128xbf16>
    %cst_27 = arith.constant dense<0.000000e+00> : vector<8x128xf32>
    %54 = tpu.matmul %1, %53, %cst_27 {dimension_numbers = #tpu.dot_dimension_numbers<[1], [0], [0], [1], [0, 0, 1, 1], [], []>} : vector<8x8xbf16>, vector<8x128xbf16>, vector<8x128xf32> -> vector<8x128xf32>
    %55 = vector.broadcast %2 : vector<8x1xf32> to vector<8x128xf32>
    %56 = arith.addf %54, %55 : vector<8x128xf32>
    %cst_28 = arith.constant 1.000000e-01 : f32
    %57 = vector.broadcast %cst_28 : f32 to vector<8x128xf32>
    %58 = arith.mulf %57, %56 : vector<8x128xf32>
    %59 = arith.maximumf %56, %58 : vector<8x128xf32>
    %60 = arith.addf %59, %52 : vector<8x128xf32>
    %61 = arith.maximumf %46, %60 : vector<8x128xf32>
    %c0_29 = arith.constant 0 : index
    %c0_30 = arith.constant 0 : index
    %62 = vector.load %arg5[%c0_29, %c0_30] : memref<72x8xbf16, #tpu.memory_space<vmem>>, vector<72x8xbf16>
    %63 = arith.truncf %61 : vector<8x128xf32> to vector<8x128xbf16>
    %cst_31 = arith.constant dense<0.000000e+00> : vector<72x128xf32>
    %64 = tpu.matmul %62, %63, %cst_31 {dimension_numbers = #tpu.dot_dimension_numbers<[1], [0], [0], [1], [0, 0, 1, 1], [], []>} : vector<72x8xbf16>, vector<8x128xbf16>, vector<72x128xf32> -> vector<72x128xf32>
    %c0_32 = arith.constant 0 : index
    %c0_33 = arith.constant 0 : index
    %65 = vector.load %arg6[%c0_32, %c0_33] : memref<72x1xf32, #tpu.memory_space<vmem>>, vector<72x1xf32>
    %66 = vector.broadcast %65 : vector<72x1xf32> to vector<72x128xf32>
    %67 = arith.addf %64, %66 : vector<72x128xf32>
    %68 = tpu.iota {dimensions = array<i32: 1>} : vector<8x128xi32>
    %c128_i32 = arith.constant 128 : i32
    %69 = arith.muli %arg0, %c128_i32 : i32
    %70 = vector.broadcast %69 : i32 to vector<8x128xi32>
    %71 = arith.addi %68, %70 : vector<8x128xi32>
    %c7_i32 = arith.constant 7 : i32
    %72 = vector.broadcast %c7_i32 : i32 to vector<8x128xi32>
    %73 = arith.andi %71, %72 : vector<8x128xi32>
    %74 = arith.sitofp %73 : vector<8x128xi32> to vector<8x128xf32>
    %c3_i32 = arith.constant 3 : i32
    %75 = vector.broadcast %c3_i32 : i32 to vector<8x128xi32>
    %76 = arith.shrsi %71, %75 : vector<8x128xi32>
    %c7_i32_34 = arith.constant 7 : i32
    %77 = vector.broadcast %c7_i32_34 : i32 to vector<8x128xi32>
    %78 = arith.andi %76, %77 : vector<8x128xi32>
    %79 = arith.sitofp %78 : vector<8x128xi32> to vector<8x128xf32>
    %80 = vector.extract_strided_slice %67 {offsets = [0, 0], sizes = [8, 128], strides = [1, 1]} : vector<72x128xf32> to vector<8x128xf32>
    %cst_35 = arith.constant 0.000000e+00 : f32
    %81 = vector.broadcast %cst_35 : f32 to vector<8x128xf32>
    %82 = arith.subf %81, %80 : vector<8x128xf32>
    %83 = math.exp %82 : vector<8x128xf32>
    %cst_36 = arith.constant 1.000000e+00 : f32
    %84 = vector.broadcast %cst_36 : f32 to vector<8x128xf32>
    %85 = arith.addf %84, %83 : vector<8x128xf32>
    %86 = tpu.reciprocal %85 {approx = true} : vector<8x128xf32> -> vector<8x128xf32>
    %87 = arith.addf %86, %74 : vector<8x128xf32>
    %cst_37 = arith.constant 2.000000e+00 : f32
    %88 = vector.broadcast %cst_37 : f32 to vector<8x128xf32>
    %89 = arith.mulf %87, %88 : vector<8x128xf32>
    %90 = vector.extract_strided_slice %67 {offsets = [8, 0], sizes = [8, 128], strides = [1, 1]} : vector<72x128xf32> to vector<8x128xf32>
    %cst_38 = arith.constant 0.000000e+00 : f32
    %91 = vector.broadcast %cst_38 : f32 to vector<8x128xf32>
    %92 = arith.subf %91, %90 : vector<8x128xf32>
    %93 = math.exp %92 : vector<8x128xf32>
    %cst_39 = arith.constant 1.000000e+00 : f32
    %94 = vector.broadcast %cst_39 : f32 to vector<8x128xf32>
    %95 = arith.addf %94, %93 : vector<8x128xf32>
    %96 = tpu.reciprocal %95 {approx = true} : vector<8x128xf32> -> vector<8x128xf32>
    %97 = arith.addf %96, %79 : vector<8x128xf32>
    %cst_40 = arith.constant 2.000000e+00 : f32
    %98 = vector.broadcast %cst_40 : f32 to vector<8x128xf32>
    %99 = arith.mulf %97, %98 : vector<8x128xf32>
    %100 = vector.extract_strided_slice %67 {offsets = [16, 0], sizes = [8, 128], strides = [1, 1]} : vector<72x128xf32> to vector<8x128xf32>
    %101 = math.exp %100 : vector<8x128xf32>
    %c0_41 = arith.constant 0 : index
    %c0_42 = arith.constant 0 : index
    %102 = vector.load %arg7[%c0_41, %c0_42] : memref<8x1xf32, #tpu.memory_space<vmem>>, vector<8x1xf32>
    %103 = vector.broadcast %102 : vector<8x1xf32> to vector<8x128xf32>
    %104 = arith.mulf %101, %103 : vector<8x128xf32>
    %105 = vector.extract_strided_slice %67 {offsets = [24, 0], sizes = [8, 128], strides = [1, 1]} : vector<72x128xf32> to vector<8x128xf32>
    %106 = math.exp %105 : vector<8x128xf32>
    %c0_43 = arith.constant 0 : index
    %c0_44 = arith.constant 0 : index
    %107 = vector.load %arg8[%c0_43, %c0_44] : memref<8x1xf32, #tpu.memory_space<vmem>>, vector<8x1xf32>
    %108 = vector.broadcast %107 : vector<8x1xf32> to vector<8x128xf32>
    %109 = arith.mulf %106, %108 : vector<8x128xf32>
    %110 = vector.extract_strided_slice %67 {offsets = [32, 0], sizes = [40, 128], strides = [1, 1]} : vector<72x128xf32> to vector<40x128xf32>
    %cst_45 = arith.constant 0.000000e+00 : f32
    %111 = vector.broadcast %cst_45 : f32 to vector<40x128xf32>
    %112 = arith.subf %111, %110 : vector<40x128xf32>
    %113 = math.exp %112 : vector<40x128xf32>
    %cst_46 = arith.constant 1.000000e+00 : f32
    %114 = vector.broadcast %cst_46 : f32 to vector<40x128xf32>
    %115 = arith.addf %114, %113 : vector<40x128xf32>
    %116 = tpu.reciprocal %115 {approx = true} : vector<40x128xf32> -> vector<40x128xf32>
    %c0_47 = arith.constant 0 : index
    %c0_48 = arith.constant 0 : index
    %117 = vector.load %arg9[%c0_47, %c0_48] : memref<72x128xf32, #tpu.memory_space<vmem>>, vector<8x128xf32>
    tpu.vector_store %arg9[%c0_47, %c0_48], %89 {strides = array<i32>} : memref<72x128xf32, #tpu.memory_space<vmem>>, vector<8x128xf32>,
    %c8 = arith.constant 8 : index
    %c0_49 = arith.constant 0 : index
    %118 = vector.load %arg9[%c8, %c0_49] : memref<72x128xf32, #tpu.memory_space<vmem>>, vector<8x128xf32>
    tpu.vector_store %arg9[%c8, %c0_49], %99 {strides = array<i32>} : memref<72x128xf32, #tpu.memory_space<vmem>>, vector<8x128xf32>,
    %c16 = arith.constant 16 : index
    %c0_50 = arith.constant 0 : index
    %119 = vector.load %arg9[%c16, %c0_50] : memref<72x128xf32, #tpu.memory_space<vmem>>, vector<8x128xf32>
    tpu.vector_store %arg9[%c16, %c0_50], %104 {strides = array<i32>} : memref<72x128xf32, #tpu.memory_space<vmem>>, vector<8x128xf32>,
    %c24 = arith.constant 24 : index
    %c0_51 = arith.constant 0 : index
    %120 = vector.load %arg9[%c24, %c0_51] : memref<72x128xf32, #tpu.memory_space<vmem>>, vector<8x128xf32>
    tpu.vector_store %arg9[%c24, %c0_51], %109 {strides = array<i32>} : memref<72x128xf32, #tpu.memory_space<vmem>>, vector<8x128xf32>,
    %c32 = arith.constant 32 : index
    %c0_52 = arith.constant 0 : index
    %121 = vector.load %arg9[%c32, %c0_52] : memref<72x128xf32, #tpu.memory_space<vmem>>, vector<40x128xf32>
    tpu.vector_store %arg9[%c32, %c0_52], %116 {strides = array<i32>} : memref<72x128xf32, #tpu.memory_space<vmem>>, vector<40x128xf32>,
    return
  }
  func.func @transform_0(%arg0: i32) -> (i32, i32, i32) {
    %c0_i32 = arith.constant 0 : i32
    %c0_i32_0 = arith.constant 0 : i32
    %c0_i32_1 = arith.constant 0 : i32
    return %c0_i32, %c0_i32_0, %arg0 : i32, i32, i32
  }
  func.func @transform_1(%arg0: i32) -> (i32, i32) {
    %c0_i32 = arith.constant 0 : i32
    %c0_i32_0 = arith.constant 0 : i32
    %c0_i32_1 = arith.constant 0 : i32
    return %c0_i32, %c0_i32_0 : i32, i32
  }
  func.func @transform_2(%arg0: i32) -> (i32, i32) {
    %c0_i32 = arith.constant 0 : i32
    %c0_i32_0 = arith.constant 0 : i32
    %c0_i32_1 = arith.constant 0 : i32
    return %c0_i32, %c0_i32_0 : i32, i32
  }
  func.func @transform_3(%arg0: i32) -> (i32, i32) {
    %c0_i32 = arith.constant 0 : i32
    %c0_i32_0 = arith.constant 0 : i32
    %c0_i32_1 = arith.constant 0 : i32
    return %c0_i32, %c0_i32_0 : i32, i32
  }
  func.func @transform_4(%arg0: i32) -> (i32, i32) {
    %c0_i32 = arith.constant 0 : i32
    %c0_i32_0 = arith.constant 0 : i32
    %c0_i32_1 = arith.constant 0 : i32
    return %c0_i32, %c0_i32_0 : i32, i32
  }
  func.func @transform_5(%arg0: i32) -> (i32, i32) {
    %c0_i32 = arith.constant 0 : i32
    %c0_i32_0 = arith.constant 0 : i32
    %c0_i32_1 = arith.constant 0 : i32
    return %c0_i32, %c0_i32_0 : i32, i32
  }
  func.func @transform_6(%arg0: i32) -> (i32, i32) {
    %c0_i32 = arith.constant 0 : i32
    %c0_i32_0 = arith.constant 0 : i32
    %c0_i32_1 = arith.constant 0 : i32
    return %c0_i32, %c0_i32_0 : i32, i32
  }
  func.func @transform_7(%arg0: i32) -> (i32, i32) {
    %c0_i32 = arith.constant 0 : i32
    %c0_i32_0 = arith.constant 0 : i32
    %c0_i32_1 = arith.constant 0 : i32
    return %c0_i32, %c0_i32_0 : i32, i32
  }
  func.func @transform_8(%arg0: i32) -> (i32, i32) {
    %c0_i32 = arith.constant 0 : i32
    %c0_i32_0 = arith.constant 0 : i32
    return %c0_i32, %arg0 : i32, i32
  }
}

</mosaic_0001>

<llo_original>
// kernel: _fused_forward.1
$region0: #{_fused_forward.1}
  #allocation0 [shape = 'u32[]', space=smem, size = 0x4, offset = 0x4, fixed_abs, tag = 'smem constant byte address 0x4 - core index']
  #allocation1 [shape = 'u32[144,128]{1,0:T(1,128)}', space=vmem, size = 0x12000, scoped, tag = 'internal scratch']
  %s0 = inlined_call_operand.vmem [shape: bf16[4,128,128], index: 0, kind: input, shape index: {}]
  %s1 = inlined_call_operand.vmem [shape: bf16[8,128], index: 1, kind: input, shape index: {}]
  %s2 = inlined_call_operand.vmem [shape: bf16[8,8], index: 2, kind: input, shape index: {}]
  %s3 = inlined_call_operand.vmem [shape: f32[8,1], index: 3, kind: input, shape index: {}]
  %s4 = inlined_call_operand.vmem [shape: bf16[72,8], index: 4, kind: input, shape index: {}]
  %s5 = inlined_call_operand.vmem [shape: f32[72,1], index: 5, kind: input, shape index: {}]
  %s6 = inlined_call_operand.vmem [shape: f32[8,1], index: 6, kind: input, shape index: {}]
  %s7 = inlined_call_operand.vmem [shape: f32[8,1], index: 7, kind: input, shape index: {}]
  %s8 = inlined_call_operand.vmem [shape: f32[72,128], index: 8, kind: output, shape index: {}]
  %s9 = sld [smem:[#allocation0]]
  $region42: #{_fused_forward.1} parent=0
    _
  %s11 = ssub.s32 1, %s9
  %s12 = scalar_select 0, %s11, %s9
  // Predicated region
  $region2: #{_fused_forward.1} parent=0 // pred_check
    _
  $region3: #{_fused_forward.1} parent=0 // pred_check_branch
    %14 = sbr.rel (0) target = $region5
  $region4: #{_fused_forward.1} parent=0 // pred_region
    _
  $region5: #{_fused_forward.1} parent=0 // pred_fallthru
    _
  // Predicated region
  $region6: #{_fused_forward.1} parent=0 // pred_check
    _
  $region7: #{_fused_forward.1} parent=0 // pred_check_branch
    %16 = sbr.rel (0) target = $region9
  $region8: #{_fused_forward.1} parent=0 // pred_region
    _
  $region9: #{_fused_forward.1} parent=0 // pred_fallthru
    _
  // Predicated region
  $region10: #{_fused_forward.1} parent=0 // pred_check
    _
  $region11: #{_fused_forward.1} parent=0 // pred_check_branch
    %18 = sbr.rel (0) target = $region13
  $region12: #{_fused_forward.1} parent=0 // pred_region
    _
  $region13: #{_fused_forward.1} parent=0 // pred_fallthru
    _
  // Predicated region
  $region14: #{_fused_forward.1} parent=0 // pred_check
    _
  $region15: #{_fused_forward.1} parent=0 // pred_check_branch
    %20 = sbr.rel (0) target = $region17
  $region16: #{_fused_forward.1} parent=0 // pred_region
    _
  $region17: #{_fused_forward.1} parent=0 // pred_fallthru
    _
  // Predicated region
  $region18: #{_fused_forward.1} parent=0 // pred_check
    _
  $region19: #{_fused_forward.1} parent=0 // pred_check_branch
    %22 = sbr.rel (0) target = $region21
  $region20: #{_fused_forward.1} parent=0 // pred_region
    _
  $region21: #{_fused_forward.1} parent=0 // pred_fallthru
    _
  // Predicated region
  $region22: #{_fused_forward.1} parent=0 // pred_check
    _
  $region23: #{_fused_forward.1} parent=0 // pred_check_branch
    %24 = sbr.rel (0) target = $region25
  $region24: #{_fused_forward.1} parent=0 // pred_region
    _
  $region25: #{_fused_forward.1} parent=0 // pred_fallthru
    _
  // Predicated region
  $region26: #{_fused_forward.1} parent=0 // pred_check
    _
  $region27: #{_fused_forward.1} parent=0 // pred_check_branch
    %26 = sbr.rel (0) target = $region29
  $region28: #{_fused_forward.1} parent=0 // pred_region
    _
  $region29: #{_fused_forward.1} parent=0 // pred_fallthru
    _
  // Predicated region
  $region30: #{_fused_forward.1} parent=0 // pred_check
    _
  $region31: #{_fused_forward.1} parent=0 // pred_check_branch
    %28 = sbr.rel (0) target = $region33
  $region32: #{_fused_forward.1} parent=0 // pred_region
    _
  $region33: #{_fused_forward.1} parent=0 // pred_fallthru
    _
  %v30 = vld [vmem:[%s1] sm:$0xf]
  %v31 = vld [vmem:[%s2] sm:$0xf]
  %v32 = vld [vmem:[%s3] sm:$0xff]
  %v33 = vld [vmem:[%s0] sm:$0xf]
  %v34 = vld [vmem:[%s0 + $0x4] sm:$0xf]
  %v35 = vld [vmem:[%s0 + $0x8] sm:$0xf]
  %v36 = vld [vmem:[%s0 + $0xc] sm:$0xf]
  %v37 = vld [vmem:[%s0 + $0x10] sm:$0xf]
  %v38 = vld [vmem:[%s0 + $0x14] sm:$0xf]
  %v39 = vld [vmem:[%s0 + $0x18] sm:$0xf]
  %v40 = vld [vmem:[%s0 + $0x1c] sm:$0xf]
  %v41 = vld [vmem:[%s0 + $0x20] sm:$0xf]
  %v42 = vld [vmem:[%s0 + $0x24] sm:$0xf]
  %v43 = vld [vmem:[%s0 + $0x28] sm:$0xf]
  %v44 = vld [vmem:[%s0 + $0x2c] sm:$0xf]
  %v45 = vld [vmem:[%s0 + $0x30] sm:$0xf]
  %v46 = vld [vmem:[%s0 + $0x34] sm:$0xf]
  %v47 = vld [vmem:[%s0 + $0x38] sm:$0xf]
  %v48 = vld [vmem:[%s0 + $0x3c] sm:$0xf]
  %v65 = vunpack.c.l.b16 %v33
  %v66 = vunpack.c.l.b16 %v34
  %v67 = vunpack.c.l.b16 %v35
  %v68 = vunpack.c.l.b16 %v36
  %v69 = vunpack.c.l.b16 %v37
  %v70 = vunpack.c.l.b16 %v38
  %v71 = vunpack.c.l.b16 %v39
  %v72 = vunpack.c.l.b16 %v40
  %v73 = vunpack.c.l.b16 %v41
  %v74 = vunpack.c.l.b16 %v42
  %v75 = vunpack.c.l.b16 %v43
  %v76 = vunpack.c.l.b16 %v44
  %v77 = vunpack.c.l.b16 %v45
  %v78 = vunpack.c.l.b16 %v46
  %v79 = vunpack.c.l.b16 %v47
  %v80 = vunpack.c.l.b16 %v48
  %v81 = vpack.c.b16 %v66, %v65
  %v82 = vpack.c.b16 %v68, %v67
  %v83 = vpack.c.b16 %v70, %v69
  %v84 = vpack.c.b16 %v72, %v71
  %v85 = vpack.c.b16 %v74, %v73
  %v86 = vpack.c.b16 %v76, %v75
  %v87 = vpack.c.b16 %v78, %v77
  %v88 = vpack.c.b16 %v80, %v79
  %97 = vmatprep.subr.bf16.mxu0 0
  %98 = vmatpush1.bf16.msra.mxu0 %v81
  %99 = vmatprep.subr.bf16.mxu0 0
  %100 = vmatpush1.bf16.msra.mxu0 %v82
  %101 = vmatprep.subr.bf16.mxu0 0
  %102 = vmatpush1.bf16.msra.mxu0 %v83
  %103 = vmatprep.subr.bf16.mxu0 0
  %104 = vmatpush1.bf16.msra.mxu0 %v84
  %105 = vmatprep.subr.bf16.mxu0 0
  %106 = vmatpush1.bf16.msra.mxu0 %v85
  %107 = vmatprep.subr.bf16.mxu0 0
  %108 = vmatpush1.bf16.msra.mxu0 %v86
  %109 = vmatprep.subr.bf16.mxu0 0
  %110 = vmatpush1.bf16.msra.mxu0 %v87
  %111 = vmatprep.subr.bf16.mxu0 0
  %112 = vmatpush1.bf16.msra.mxu0 %v88
  %113 = vmatprep.subr.bf16.mxu0 0
  %114 = vmatpush1.bf16.msra.mxu0 0
  %115 = vmatprep.subr.bf16.mxu0 0
  %116 = vmatpush1.bf16.msra.mxu0 0
  %117 = vmatprep.subr.bf16.mxu0 0
  %118 = vmatpush1.bf16.msra.mxu0 0
  %119 = vmatprep.subr.bf16.mxu0 0
  %120 = vmatpush1.bf16.msra.mxu0 0
  %121 = vmatprep.subr.bf16.mxu0 0
  %122 = vmatpush1.bf16.msra.mxu0 0
  %123 = vmatprep.subr.bf16.mxu0 0
  %124 = vmatpush1.bf16.msra.mxu0 0
  %125 = vmatprep.subr.bf16.mxu0 0
  %126 = vmatpush1.bf16.msra.mxu0 0
  %127 = vmatprep.subr.bf16.mxu0 0
  %128 = vmatpush1.bf16.msra.mxu0 0
  %129 = vmatprep.mubr.bf16.mxu0 0
  %130 = vmatmul.mubr.bf16.gmra.mrb[0].mxu0 %v30
  %v131 = vpop.f32.mrb[0].mxu0
  %v132 = vadd.f32 0.0, %v131
  %v133 = vpop.f32.mrb[0].mxu0
  %v134 = vpop.f32.mrb[0].mxu0
  %v135 = vpop.f32.mrb[0].mxu0
  %136 = vdwg.mxu0
  %v137 = vmul.f32 %v132, 0.1
  %v138 = vmax.f32 %v132, %v137
  %v139 = vpack.c.bf16 %v138, %v138
  %141 = vset.pattern.permute.xlu0 0
  %142 = vperm.xlu0 %141, %v32
  %v143 = vpop.permute.xlu0 %142
  %vm145 = vcmask 64512
  %v147 = vsel %vm145, %v31, 0
  %vm149 = vcmask 1043456
  %v151 = vsel %vm149, %v139, 0
  %153 = vmatprep.subr.bf16.mxu0 0
  %154 = vmatpush1.bf16.msra.mxu0 %v151
  %155 = vmatprep.subr.bf16.mxu0 0
  %156 = vmatpush1.bf16.msra.mxu0 0
  %157 = vmatprep.subr.bf16.mxu0 0
  %158 = vmatpush1.bf16.msra.mxu0 0
  %159 = vmatprep.subr.bf16.mxu0 0
  %160 = vmatpush1.bf16.msra.mxu0 0
  %161 = vmatprep.subr.bf16.mxu0 0
  %162 = vmatpush1.bf16.msra.mxu0 0
  %163 = vmatprep.subr.bf16.mxu0 0
  %164 = vmatpush1.bf16.msra.mxu0 0
  %165 = vmatprep.subr.bf16.mxu0 0
  %166 = vmatpush1.bf16.msra.mxu0 0
  %167 = vmatprep.subr.bf16.mxu0 0
  %168 = vmatpush1.bf16.msra.mxu0 0
  %169 = vmatprep.subr.bf16.mxu0 0
  %170 = vmatpush1.bf16.msra.mxu0 0
  %171 = vmatprep.subr.bf16.mxu0 0
  %172 = vmatpush1.bf16.msra.mxu0 0
  %173 = vmatprep.subr.bf16.mxu0 0
  %174 = vmatpush1.bf16.msra.mxu0 0
  %175 = vmatprep.subr.bf16.mxu0 0
  %176 = vmatpush1.bf16.msra.mxu0 0
  %177 = vmatprep.subr.bf16.mxu0 0
  %178 = vmatpush1.bf16.msra.mxu0 0
  %179 = vmatprep.subr.bf16.mxu0 0
  %180 = vmatpush1.bf16.msra.mxu0 0
  %181 = vmatprep.subr.bf16.mxu0 0
  %182 = vmatpush1.bf16.msra.mxu0 0
  %183 = vmatprep.subr.bf16.mxu0 0
  %184 = vmatpush1.bf16.msra.mxu0 0
  %185 = vmatprep.mubr.bf16.mxu0 0
  %186 = vmatmul.mubr.bf16.gmra.mrb[0].mxu0 %v147
  %v187 = vpop.f32.mrb[0].mxu0
  %v188 = vadd.f32 %v143, %v187
  %v189 = vpop.f32.mrb[0].mxu0
  %v190 = vpop.f32.mrb[0].mxu0
  %v191 = vpop.f32.mrb[0].mxu0
  %192 = vdwg.mxu0
  %v193 = vmul.f32 %v188, 0.1
  %v194 = vmax.f32 %v188, %v193
  %v195 = vadd.f32 %v194, %v138
  %s196 = scalar_lea.vmem %s0, 64
  %v197 = vld [vmem:[%s196] sm:$0xf]
  %v198 = vld [vmem:[%s196 + $0x4] sm:$0xf]
  %v199 = vld [vmem:[%s196 + $0x8] sm:$0xf]
  %v200 = vld [vmem:[%s196 + $0xc] sm:$0xf]
  %v201 = vld [vmem:[%s196 + $0x10] sm:$0xf]
  %v202 = vld [vmem:[%s196 + $0x14] sm:$0xf]
  %v203 = vld [vmem:[%s196 + $0x18] sm:$0xf]
  %v204 = vld [vmem:[%s196 + $0x1c] sm:$0xf]
  %v205 = vld [vmem:[%s196 + $0x20] sm:$0xf]
  %v206 = vld [vmem:[%s196 + $0x24] sm:$0xf]
  %v207 = vld [vmem:[%s196 + $0x28] sm:$0xf]
  %v208 = vld [vmem:[%s196 + $0x2c] sm:$0xf]
  %v209 = vld [vmem:[%s196 + $0x30] sm:$0xf]
  %v210 = vld [vmem:[%s196 + $0x34] sm:$0xf]
  %v211 = vld [vmem:[%s196 + $0x38] sm:$0xf]
  %v212 = vld [vmem:[%s196 + $0x3c] sm:$0xf]
  %v229 = vunpack.c.l.b16 %v197
  %v230 = vunpack.c.l.b16 %v198
  %v231 = vunpack.c.l.b16 %v199
  %v232 = vunpack.c.l.b16 %v200
  %v233 = vunpack.c.l.b16 %v201
  %v234 = vunpack.c.l.b16 %v202
  %v235 = vunpack.c.l.b16 %v203
  %v236 = vunpack.c.l.b16 %v204
  %v237 = vunpack.c.l.b16 %v205
  %v238 = vunpack.c.l.b16 %v206
  %v239 = vunpack.c.l.b16 %v207
  %v240 = vunpack.c.l.b16 %v208
  %v241 = vunpack.c.l.b16 %v209
  %v242 = vunpack.c.l.b16 %v210
  %v243 = vunpack.c.l.b16 %v211
  %v244 = vunpack.c.l.b16 %v212
  %v245 = vpack.c.b16 %v230, %v229
  %v246 = vpack.c.b16 %v232, %v231
  %v247 = vpack.c.b16 %v234, %v233
  %v248 = vpack.c.b16 %v236, %v235
  %v249 = vpack.c.b16 %v238, %v237
  %v250 = vpack.c.b16 %v240, %v239
  %v251 = vpack.c.b16 %v242, %v241
  %v252 = vpack.c.b16 %v244, %v243
  %261 = vmatprep.subr.bf16.mxu0 0
  %262 = vmatpush1.bf16.msra.mxu0 %v245
  %263 = vmatprep.subr.bf16.mxu0 0
  %264 = vmatpush1.bf16.msra.mxu0 %v246
  %265 = vmatprep.subr.bf16.mxu0 0
  %266 = vmatpush1.bf16.msra.mxu0 %v247
  %267 = vmatprep.subr.bf16.mxu0 0
  %268 = vmatpush1.bf16.msra.mxu0 %v248
  %269 = vmatprep.subr.bf16.mxu0 0
  %270 = vmatpush1.bf16.msra.mxu0 %v249
  %271 = vmatprep.subr.bf16.mxu0 0
  %272 = vmatpush1.bf16.msra.mxu0 %v250
  %273 = vmatprep.subr.bf16.mxu0 0
  %274 = vmatpush1.bf16.msra.mxu0 %v251
  %275 = vmatprep.subr.bf16.mxu0 0
  %276 = vmatpush1.bf16.msra.mxu0 %v252
  %277 = vmatprep.subr.bf16.mxu0 0
  %278 = vmatpush1.bf16.msra.mxu0 0
  %279 = vmatprep.subr.bf16.mxu0 0
  %280 = vmatpush1.bf16.msra.mxu0 0
  %281 = vmatprep.subr.bf16.mxu0 0
  %282 = vmatpush1.bf16.msra.mxu0 0
  %283 = vmatprep.subr.bf16.mxu0 0
  %284 = vmatpush1.bf16.msra.mxu0 0
  %285 = vmatprep.subr.bf16.mxu0 0
  %286 = vmatpush1.bf16.msra.mxu0 0
  %287 = vmatprep.subr.bf16.mxu0 0
  %288 = vmatpush1.bf16.msra.mxu0 0
  %289 = vmatprep.subr.bf16.mxu0 0
  %290 = vmatpush1.bf16.msra.mxu0 0
  %291 = vmatprep.subr.bf16.mxu0 0
  %292 = vmatpush1.bf16.msra.mxu0 0
  %293 = vmatprep.mubr.bf16.mxu0 0
  %294 = vmatmul.mubr.bf16.gmra.mrb[0].mxu0 %v30
  %v295 = vpop.f32.mrb[0].mxu0
  %v296 = vadd.f32 0.0, %v295
  %v297 = vpop.f32.mrb[0].mxu0
  %v298 = vpop.f32.mrb[0].mxu0
  %v299 = vpop.f32.mrb[0].mxu0
  %300 = vdwg.mxu0
  %v301 = vmul.f32 %v296, 0.1
  %v302 = vmax.f32 %v296, %v301
  %v303 = vpack.c.bf16 %v302, %v302
  %v305 = vsel %vm149, %v303, 0
  %307 = vmatprep.subr.bf16.mxu0 0
  %308 = vmatpush1.bf16.msra.mxu0 %v305
  %309 = vmatprep.subr.bf16.mxu0 0
  %310 = vmatpush1.bf16.msra.mxu0 0
  %311 = vmatprep.subr.bf16.mxu0 0
  %312 = vmatpush1.bf16.msra.mxu0 0
  %313 = vmatprep.subr.bf16.mxu0 0
  %314 = vmatpush1.bf16.msra.mxu0 0
  %315 = vmatprep.subr.bf16.mxu0 0
  %316 = vmatpush1.bf16.msra.mxu0 0
  %317 = vmatprep.subr.bf16.mxu0 0
  %318 = vmatpush1.bf16.msra.mxu0 0
  %319 = vmatprep.subr.bf16.mxu0 0
  %320 = vmatpush1.bf16.msra.mxu0 0
  %321 = vmatprep.subr.bf16.mxu0 0
  %322 = vmatpush1.bf16.msra.mxu0 0
  %323 = vmatprep.subr.bf16.mxu0 0
  %324 = vmatpush1.bf16.msra.mxu0 0
  %325 = vmatprep.subr.bf16.mxu0 0
  %326 = vmatpush1.bf16.msra.mxu0 0
  %327 = vmatprep.subr.bf16.mxu0 0
  %328 = vmatpush1.bf16.msra.mxu0 0
  %329 = vmatprep.subr.bf16.mxu0 0
  %330 = vmatpush1.bf16.msra.mxu0 0
  %331 = vmatprep.subr.bf16.mxu0 0
  %332 = vmatpush1.bf16.msra.mxu0 0
  %333 = vmatprep.subr.bf16.mxu0 0
  %334 = vmatpush1.bf16.msra.mxu0 0
  %335 = vmatprep.subr.bf16.mxu0 0
  %336 = vmatpush1.bf16.msra.mxu0 0
  %337 = vmatprep.subr.bf16.mxu0 0
  %338 = vmatpush1.bf16.msra.mxu0 0
  %339 = vmatprep.mubr.bf16.mxu0 0
  %340 = vmatmul.mubr.bf16.gmra.mrb[0].mxu0 %v147
  %v341 = vpop.f32.mrb[0].mxu0
  %v342 = vadd.f32 %v143, %v341
  %v343 = vpop.f32.mrb[0].mxu0
  %v344 = vpop.f32.mrb[0].mxu0
  %v345 = vpop.f32.mrb[0].mxu0
  %346 = vdwg.mxu0
  %v347 = vmul.f32 %v342, 0.1
  %v348 = vmax.f32 %v342, %v347
  %v349 = vadd.f32 %v348, %v302
  %v350 = vmax.f32 %v195, %v349
  %s351 = scalar_lea.vmem %s0, 128
  %v352 = vld [vmem:[%s351] sm:$0xf]
  %v353 = vld [vmem:[%s351 + $0x4] sm:$0xf]
  %v354 = vld [vmem:[%s351 + $0x8] sm:$0xf]
  %v355 = vld [vmem:[%s351 + $0xc] sm:$0xf]
  %v356 = vld [vmem:[%s351 + $0x10] sm:$0xf]
  %v357 = vld [vmem:[%s351 + $0x14] sm:$0xf]
  %v358 = vld [vmem:[%s351 + $0x18] sm:$0xf]
  %v359 = vld [vmem:[%s351 + $0x1c] sm:$0xf]
  %v360 = vld [vmem:[%s351 + $0x20] sm:$0xf]
  %v361 = vld [vmem:[%s351 + $0x24] sm:$0xf]
  %v362 = vld [vmem:[%s351 + $0x28] sm:$0xf]
  %v363 = vld [vmem:[%s351 + $0x2c] sm:$0xf]
  %v364 = vld [vmem:[%s351 + $0x30] sm:$0xf]
  %v365 = vld [vmem:[%s351 + $0x34] sm:$0xf]
  %v366 = vld [vmem:[%s351 + $0x38] sm:$0xf]
  %v367 = vld [vmem:[%s351 + $0x3c] sm:$0xf]
  %v384 = vunpack.c.l.b16 %v352
  %v385 = vunpack.c.l.b16 %v353
  %v386 = vunpack.c.l.b16 %v354
  %v387 = vunpack.c.l.b16 %v355
  %v388 = vunpack.c.l.b16 %v356
  %v389 = vunpack.c.l.b16 %v357
  %v390 = vunpack.c.l.b16 %v358
  %v391 = vunpack.c.l.b16 %v359
  %v392 = vunpack.c.l.b16 %v360
  %v393 = vunpack.c.l.b16 %v361
  %v394 = vunpack.c.l.b16 %v362
  %v395 = vunpack.c.l.b16 %v363
  %v396 = vunpack.c.l.b16 %v364
  %v397 = vunpack.c.l.b16 %v365
  %v398 = vunpack.c.l.b16 %v366
  %v399 = vunpack.c.l.b16 %v367
  %v400 = vpack.c.b16 %v385, %v384
  %v401 = vpack.c.b16 %v387, %v386
  %v402 = vpack.c.b16 %v389, %v388
  %v403 = vpack.c.b16 %v391, %v390
  %v404 = vpack.c.b16 %v393, %v392
  %v405 = vpack.c.b16 %v395, %v394
  %v406 = vpack.c.b16 %v397, %v396
  %v407 = vpack.c.b16 %v399, %v398
  %416 = vmatprep.subr.bf16.mxu0 0
  %417 = vmatpush1.bf16.msra.mxu0 %v400
  %418 = vmatprep.subr.bf16.mxu0 0
  %419 = vmatpush1.bf16.msra.mxu0 %v401
  %420 = vmatprep.subr.bf16.mxu0 0
  %421 = vmatpush1.bf16.msra.mxu0 %v402
  %422 = vmatprep.subr.bf16.mxu0 0
  %423 = vmatpush1.bf16.msra.mxu0 %v403
  %424 = vmatprep.subr.bf16.mxu0 0
  %425 = vmatpush1.bf16.msra.mxu0 %v404
  %426 = vmatprep.subr.bf16.mxu0 0
  %427 = vmatpush1.bf16.msra.mxu0 %v405
  %428 = vmatprep.subr.bf16.mxu0 0
  %429 = vmatpush1.bf16.msra.mxu0 %v406
  %430 = vmatprep.subr.bf16.mxu0 0
  %431 = vmatpush1.bf16.msra.mxu0 %v407
  %432 = vmatprep.subr.bf16.mxu0 0
  %433 = vmatpush1.bf16.msra.mxu0 0
  %434 = vmatprep.subr.bf16.mxu0 0
  %435 = vmatpush1.bf16.msra.mxu0 0
  %436 = vmatprep.subr.bf16.mxu0 0
  %437 = vmatpush1.bf16.msra.mxu0 0
  %438 = vmatprep.subr.bf16.mxu0 0
  %439 = vmatpush1.bf16.msra.mxu0 0
  %440 = vmatprep.subr.bf16.mxu0 0
  %441 = vmatpush1.bf16.msra.mxu0 0
  %442 = vmatprep.subr.bf16.mxu0 0
  %443 = vmatpush1.bf16.msra.mxu0 0
  %444 = vmatprep.subr.bf16.mxu0 0
  %445 = vmatpush1.bf16.msra.mxu0 0
  %446 = vmatprep.subr.bf16.mxu0 0
  %447 = vmatpush1.bf16.msra.mxu0 0
  %448 = vmatprep.mubr.bf16.mxu0 0
  %449 = vmatmul.mubr.bf16.gmra.mrb[0].mxu0 %v30
  %v450 = vpop.f32.mrb[0].mxu0
  %v451 = vadd.f32 0.0, %v450
  %v452 = vpop.f32.mrb[0].mxu0
  %v453 = vpop.f32.mrb[0].mxu0
  %v454 = vpop.f32.mrb[0].mxu0
  %455 = vdwg.mxu0
  %v456 = vmul.f32 %v451, 0.1
  %v457 = vmax.f32 %v451, %v456
  %v458 = vpack.c.bf16 %v457, %v457
  %v460 = vsel %vm149, %v458, 0
  %462 = vmatprep.subr.bf16.mxu0 0
  %463 = vmatpush1.bf16.msra.mxu0 %v460
  %464 = vmatprep.subr.bf16.mxu0 0
  %465 = vmatpush1.bf16.msra.mxu0 0
  %466 = vmatprep.subr.bf16.mxu0 0
  %467 = vmatpush1.bf16.msra.mxu0 0
  %468 = vmatprep.subr.bf16.mxu0 0
  %469 = vmatpush1.bf16.msra.mxu0 0
  %470 = vmatprep.subr.bf16.mxu0 0
  %471 = vmatpush1.bf16.msra.mxu0 0
  %472 = vmatprep.subr.bf16.mxu0 0
  %473 = vmatpush1.bf16.msra.mxu0 0
  %474 = vmatprep.subr.bf16.mxu0 0
  %475 = vmatpush1.bf16.msra.mxu0 0
  %476 = vmatprep.subr.bf16.mxu0 0
  %477 = vmatpush1.bf16.msra.mxu0 0
  %478 = vmatprep.subr.bf16.mxu0 0
  %479 = vmatpush1.bf16.msra.mxu0 0
  %480 = vmatprep.subr.bf16.mxu0 0
  %481 = vmatpush1.bf16.msra.mxu0 0
  %482 = vmatprep.subr.bf16.mxu0 0
  %483 = vmatpush1.bf16.msra.mxu0 0
  %484 = vmatprep.subr.bf16.mxu0 0
  %485 = vmatpush1.bf16.msra.mxu0 0
  %486 = vmatprep.subr.bf16.mxu0 0
  %487 = vmatpush1.bf16.msra.mxu0 0
  %488 = vmatprep.subr.bf16.mxu0 0
  %489 = vmatpush1.bf16.msra.mxu0 0
  %490 = vmatprep.subr.bf16.mxu0 0
  %491 = vmatpush1.bf16.msra.mxu0 0
  %492 = vmatprep.subr.bf16.mxu0 0
  %493 = vmatpush1.bf16.msra.mxu0 0
  %494 = vmatprep.mubr.bf16.mxu0 0
  %495 = vmatmul.mubr.bf16.gmra.mrb[0].mxu0 %v147
  %v496 = vpop.f32.mrb[0].mxu0
  %v497 = vadd.f32 %v143, %v496
  %v498 = vpop.f32.mrb[0].mxu0
  %v499 = vpop.f32.mrb[0].mxu0
  %v500 = vpop.f32.mrb[0].mxu0
  %501 = vdwg.mxu0
  %v502 = vmul.f32 %v497, 0.1
  %v503 = vmax.f32 %v497, %v502
  %v504 = vadd.f32 %v503, %v457
  %v505 = vmax.f32 %v350, %v504
  %s506 = scalar_lea.vmem %s0, 192
  %v507 = vld [vmem:[%s506] sm:$0xf]
  %v508 = vld [vmem:[%s506 + $0x4] sm:$0xf]
  %v509 = vld [vmem:[%s506 + $0x8] sm:$0xf]
  %v510 = vld [vmem:[%s506 + $0xc] sm:$0xf]
  %v511 = vld [vmem:[%s506 + $0x10] sm:$0xf]
  %v512 = vld [vmem:[%s506 + $0x14] sm:$0xf]
  %v513 = vld [vmem:[%s506 + $0x18] sm:$0xf]
  %v514 = vld [vmem:[%s506 + $0x1c] sm:$0xf]
  %v515 = vld [vmem:[%s506 + $0x20] sm:$0xf]
  %v516 = vld [vmem:[%s506 + $0x24] sm:$0xf]
  %v517 = vld [vmem:[%s506 + $0x28] sm:$0xf]
  %v518 = vld [vmem:[%s506 + $0x2c] sm:$0xf]
  %v519 = vld [vmem:[%s506 + $0x30] sm:$0xf]
  %v520 = vld [vmem:[%s506 + $0x34] sm:$0xf]
  %v521 = vld [vmem:[%s506 + $0x38] sm:$0xf]
  %v522 = vld [vmem:[%s506 + $0x3c] sm:$0xf]
  %v539 = vunpack.c.l.b16 %v507
  %v540 = vunpack.c.l.b16 %v508
  %v541 = vunpack.c.l.b16 %v509
  %v542 = vunpack.c.l.b16 %v510
  %v543 = vunpack.c.l.b16 %v511
  %v544 = vunpack.c.l.b16 %v512
  %v545 = vunpack.c.l.b16 %v513
  %v546 = vunpack.c.l.b16 %v514
  %v547 = vunpack.c.l.b16 %v515
  %v548 = vunpack.c.l.b16 %v516
  %v549 = vunpack.c.l.b16 %v517
  %v550 = vunpack.c.l.b16 %v518
  %v551 = vunpack.c.l.b16 %v519
  %v552 = vunpack.c.l.b16 %v520
  %v553 = vunpack.c.l.b16 %v521
  %v554 = vunpack.c.l.b16 %v522
  %v555 = vpack.c.b16 %v540, %v539
  %v556 = vpack.c.b16 %v542, %v541
  %v557 = vpack.c.b16 %v544, %v543
  %v558 = vpack.c.b16 %v546, %v545
  %v559 = vpack.c.b16 %v548, %v547
  %v560 = vpack.c.b16 %v550, %v549
  %v561 = vpack.c.b16 %v552, %v551
  %v562 = vpack.c.b16 %v554, %v553
  %571 = vmatprep.subr.bf16.mxu0 0
  %572 = vmatpush1.bf16.msra.mxu0 %v555
  %573 = vmatprep.subr.bf16.mxu0 0
  %574 = vmatpush1.bf16.msra.mxu0 %v556
  %575 = vmatprep.subr.bf16.mxu0 0
  %576 = vmatpush1.bf16.msra.mxu0 %v557
  %577 = vmatprep.subr.bf16.mxu0 0
  %578 = vmatpush1.bf16.msra.mxu0 %v558
  %579 = vmatprep.subr.bf16.mxu0 0
  %580 = vmatpush1.bf16.msra.mxu0 %v559
  %581 = vmatprep.subr.bf16.mxu0 0
  %582 = vmatpush1.bf16.msra.mxu0 %v560
  %583 = vmatprep.subr.bf16.mxu0 0
  %584 = vmatpush1.bf16.msra.mxu0 %v561
  %585 = vmatprep.subr.bf16.mxu0 0
  %586 = vmatpush1.bf16.msra.mxu0 %v562
  %587 = vmatprep.subr.bf16.mxu0 0
  %588 = vmatpush1.bf16.msra.mxu0 0
  %589 = vmatprep.subr.bf16.mxu0 0
  %590 = vmatpush1.bf16.msra.mxu0 0
  %591 = vmatprep.subr.bf16.mxu0 0
  %592 = vmatpush1.bf16.msra.mxu0 0
  %593 = vmatprep.subr.bf16.mxu0 0
  %594 = vmatpush1.bf16.msra.mxu0 0
  %595 = vmatprep.subr.bf16.mxu0 0
  %596 = vmatpush1.bf16.msra.mxu0 0
  %597 = vmatprep.subr.bf16.mxu0 0
  %598 = vmatpush1.bf16.msra.mxu0 0
  %599 = vmatprep.subr.bf16.mxu0 0
  %600 = vmatpush1.bf16.msra.mxu0 0
  %601 = vmatprep.subr.bf16.mxu0 0
  %602 = vmatpush1.bf16.msra.mxu0 0
  %603 = vmatprep.mubr.bf16.mxu0 0
  %604 = vmatmul.mubr.bf16.gmra.mrb[0].mxu0 %v30
  %v605 = vpop.f32.mrb[0].mxu0
  %v606 = vadd.f32 0.0, %v605
  %v607 = vpop.f32.mrb[0].mxu0
  %v608 = vpop.f32.mrb[0].mxu0
  %v609 = vpop.f32.mrb[0].mxu0
  %610 = vdwg.mxu0
  %v611 = vmul.f32 %v606, 0.1
  %v612 = vmax.f32 %v606, %v611
  %v613 = vpack.c.bf16 %v612, %v612
  %v615 = vsel %vm149, %v613, 0
  %617 = vmatprep.subr.bf16.mxu0 0
  %618 = vmatpush1.bf16.msra.mxu0 %v615
  %619 = vmatprep.subr.bf16.mxu0 0
  %620 = vmatpush1.bf16.msra.mxu0 0
  %621 = vmatprep.subr.bf16.mxu0 0
  %622 = vmatpush1.bf16.msra.mxu0 0
  %623 = vmatprep.subr.bf16.mxu0 0
  %624 = vmatpush1.bf16.msra.mxu0 0
  %625 = vmatprep.subr.bf16.mxu0 0
  %626 = vmatpush1.bf16.msra.mxu0 0
  %627 = vmatprep.subr.bf16.mxu0 0
  %628 = vmatpush1.bf16.msra.mxu0 0
  %629 = vmatprep.subr.bf16.mxu0 0
  %630 = vmatpush1.bf16.msra.mxu0 0
  %631 = vmatprep.subr.bf16.mxu0 0
  %632 = vmatpush1.bf16.msra.mxu0 0
  %633 = vmatprep.subr.bf16.mxu0 0
  %634 = vmatpush1.bf16.msra.mxu0 0
  %635 = vmatprep.subr.bf16.mxu0 0
  %636 = vmatpush1.bf16.msra.mxu0 0
  %637 = vmatprep.subr.bf16.mxu0 0
  %638 = vmatpush1.bf16.msra.mxu0 0
  %639 = vmatprep.subr.bf16.mxu0 0
  %640 = vmatpush1.bf16.msra.mxu0 0
  %641 = vmatprep.subr.bf16.mxu0 0
  %642 = vmatpush1.bf16.msra.mxu0 0
  %643 = vmatprep.subr.bf16.mxu0 0
  %644 = vmatpush1.bf16.msra.mxu0 0
  %645 = vmatprep.subr.bf16.mxu0 0
  %646 = vmatpush1.bf16.msra.mxu0 0
  %647 = vmatprep.subr.bf16.mxu0 0
  %648 = vmatpush1.bf16.msra.mxu0 0
  %649 = vmatprep.mubr.bf16.mxu0 0
  %650 = vmatmul.mubr.bf16.gmra.mrb[0].mxu0 %v147
  %v651 = vpop.f32.mrb[0].mxu0
  %v652 = vadd.f32 %v143, %v651
  %v653 = vpop.f32.mrb[0].mxu0
  %v654 = vpop.f32.mrb[0].mxu0
  %v655 = vpop.f32.mrb[0].mxu0
  %656 = vdwg.mxu0
  %v657 = vmul.f32 %v652, 0.1
  %v658 = vmax.f32 %v652, %v657
  %v659 = vadd.f32 %v658, %v612
  %v660 = vmax.f32 %v505, %v659
  %v661 = vld [vmem:[%s4] sm:$0xf]
  %v662 = vld [vmem:[%s4 + $0x4] sm:$0xf]
  %v663 = vld [vmem:[%s4 + $0x8] sm:$0xf]
  %v664 = vld [vmem:[%s4 + $0xc] sm:$0xf]
  %v665 = vld [vmem:[%s4 + $0x10] sm:$0xf]
  %v666 = vld [vmem:[%s4 + $0x14] sm:$0xf]
  %v667 = vld [vmem:[%s4 + $0x18] sm:$0xf]
  %v668 = vld [vmem:[%s4 + $0x1c] sm:$0xf]
  %v669 = vld [vmem:[%s4 + $0x20] sm:$0xf]
  %v670 = vpack.c.bf16 %v660, %v660
  %v671 = vld [vmem:[%s5] sm:$0xff]
  %v672 = vld [vmem:[%s5 + $0x8] sm:$0xff]
  %v673 = vld [vmem:[%s5 + $0x10] sm:$0xff]
  %v674 = vld [vmem:[%s5 + $0x18] sm:$0xff]
  %v675 = vld [vmem:[%s5 + $0x20] sm:$0xff]
  %v676 = vld [vmem:[%s5 + $0x28] sm:$0xff]
  %v677 = vld [vmem:[%s5 + $0x30] sm:$0xff]
  %v678 = vld [vmem:[%s5 + $0x38] sm:$0xff]
  %v679 = vld [vmem:[%s5 + $0x40] sm:$0xff]
  %681 = vset.pattern.permute.xlu0 0
  %682 = vperm.xlu0 %681, %v671
  %v683 = vpop.permute.xlu0 %682
  %686 = vset.pattern.permute.xlu0 0
  %687 = vperm.xlu0 %686, %v672
  %v688 = vpop.permute.xlu0 %687
  %691 = vset.pattern.permute.xlu0 0
  %692 = vperm.xlu0 %691, %v673
  %v693 = vpop.permute.xlu0 %692
  %696 = vset.pattern.permute.xlu0 0
  %697 = vperm.xlu0 %696, %v674
  %v698 = vpop.permute.xlu0 %697
  %701 = vset.pattern.permute.xlu0 0
  %702 = vperm.xlu0 %701, %v675
  %v703 = vpop.permute.xlu0 %702
  %706 = vset.pattern.permute.xlu0 0
  %707 = vperm.xlu0 %706, %v676
  %v708 = vpop.permute.xlu0 %707
  %711 = vset.pattern.permute.xlu0 0
  %712 = vperm.xlu0 %711, %v677
  %v713 = vpop.permute.xlu0 %712
  %716 = vset.pattern.permute.xlu0 0
  %717 = vperm.xlu0 %716, %v678
  %v718 = vpop.permute.xlu0 %717
  %721 = vset.pattern.permute.xlu0 0
  %722 = vperm.xlu0 %721, %v679
  %v723 = vpop.permute.xlu0 %722
  %v734 = vunpack.c.l.b16 %v661
  %v735 = vunpack.c.l.b16 %v662
  %v736 = vunpack.c.l.b16 %v663
  %v737 = vunpack.c.l.b16 %v664
  %v738 = vunpack.c.l.b16 %v665
  %v739 = vunpack.c.l.b16 %v666
  %v740 = vunpack.c.l.b16 %v667
  %v741 = vunpack.c.l.b16 %v668
  %v742 = vunpack.c.l.b16 %v669
  %v743 = vpack.c.b16 %v735, %v734
  %v744 = vpack.c.b16 %v737, %v736
  %v745 = vpack.c.b16 %v739, %v738
  %v746 = vpack.c.b16 %v741, %v740
  %v747 = vpack.c.b16 %v742, %v742
  %v749 = vsel %vm145, %v743, 0
  %v752 = vsel %vm145, %v744, 0
  %v755 = vsel %vm145, %v745, 0
  %v758 = vsel %vm145, %v746, 0
  %v761 = vsel %vm145, %v747, 0
  %v764 = vsel %vm149, %v670, 0
  %766 = vmatprep.subr.bf16.mxu0 0
  %767 = vmatpush1.bf16.msra.mxu0 %v764
  %768 = vmatprep.subr.bf16.mxu0 0
  %769 = vmatpush1.bf16.msra.mxu0 0
  %770 = vmatprep.subr.bf16.mxu0 0
  %771 = vmatpush1.bf16.msra.mxu0 0
  %772 = vmatprep.subr.bf16.mxu0 0
  %773 = vmatpush1.bf16.msra.mxu0 0
  %774 = vmatprep.subr.bf16.mxu0 0
  %775 = vmatpush1.bf16.msra.mxu0 0
  %776 = vmatprep.subr.bf16.mxu0 0
  %777 = vmatpush1.bf16.msra.mxu0 0
  %778 = vmatprep.subr.bf16.mxu0 0
  %779 = vmatpush1.bf16.msra.mxu0 0
  %780 = vmatprep.subr.bf16.mxu0 0
  %781 = vmatpush1.bf16.msra.mxu0 0
  %782 = vmatprep.subr.bf16.mxu0 0
  %783 = vmatpush1.bf16.msra.mxu0 0
  %784 = vmatprep.subr.bf16.mxu0 0
  %785 = vmatpush1.bf16.msra.mxu0 0
  %786 = vmatprep.subr.bf16.mxu0 0
  %787 = vmatpush1.bf16.msra.mxu0 0
  %788 = vmatprep.subr.bf16.mxu0 0
  %789 = vmatpush1.bf16.msra.mxu0 0
  %790 = vmatprep.subr.bf16.mxu0 0
  %791 = vmatpush1.bf16.msra.mxu0 0
  %792 = vmatprep.subr.bf16.mxu0 0
  %793 = vmatpush1.bf16.msra.mxu0 0
  %794 = vmatprep.subr.bf16.mxu0 0
  %795 = vmatpush1.bf16.msra.mxu0 0
  %796 = vmatprep.subr.bf16.mxu0 0
  %797 = vmatpush1.bf16.msra.mxu0 0
  %798 = vmatprep.mubr.bf16.mxu0 0
  %799 = vmatmul.mubr.bf16.gmra.mrb[0].mxu0 %v749
  %v800 = vpop.f32.mrb[0].mxu0
  %v801 = vadd.f32 %v683, %v800
  %v802 = vpop.f32.mrb[0].mxu0
  %v803 = vpop.f32.mrb[0].mxu0
  %v804 = vadd.f32 %v688, %v803
  %v805 = vpop.f32.mrb[0].mxu0
  %806 = vmatprep.mubr.bf16.mxu0 0
  %807 = vmatmul.mubr.bf16.gmra.mrb[0].mxu0 %v752
  %v808 = vpop.f32.mrb[0].mxu0
  %v809 = vadd.f32 %v693, %v808
  %v810 = vpop.f32.mrb[0].mxu0
  %v811 = vpop.f32.mrb[0].mxu0
  %v812 = vadd.f32 %v698, %v811
  %v813 = vpop.f32.mrb[0].mxu0
  %814 = vmatprep.mubr.bf16.mxu0 0
  %815 = vmatmul.mubr.bf16.gmra.mrb[0].mxu0 %v755
  %v816 = vpop.f32.mrb[0].mxu0
  %v817 = vadd.f32 %v703, %v816
  %v818 = vpop.f32.mrb[0].mxu0
  %v819 = vpop.f32.mrb[0].mxu0
  %v820 = vadd.f32 %v708, %v819
  %v821 = vpop.f32.mrb[0].mxu0
  %822 = vmatprep.mubr.bf16.mxu0 0
  %823 = vmatmul.mubr.bf16.gmra.mrb[0].mxu0 %v758
  %v824 = vpop.f32.mrb[0].mxu0
  %v825 = vadd.f32 %v713, %v824
  %v826 = vpop.f32.mrb[0].mxu0
  %v827 = vpop.f32.mrb[0].mxu0
  %v828 = vadd.f32 %v718, %v827
  %v829 = vpop.f32.mrb[0].mxu0
  %830 = vmatprep.mubr.bf16.mxu0 0
  %831 = vmatmul.mubr.bf16.gmra.mrb[0].mxu0 %v761
  %v832 = vpop.f32.mrb[0].mxu0
  %v833 = vadd.f32 %v723, %v832
  %v834 = vpop.f32.mrb[0].mxu0
  %v835 = vpop.f32.mrb[0].mxu0
  %v836 = vpop.f32.mrb[0].mxu0
  %837 = vdwg.mxu0
  %v838 = vlaneseq
  %v839 = vand.u32 %v838, 127
  %s840 = smul.u32 0, 128
  %v841 = vstv %s840
  %v842 = vadd.s32 %v839, %v841
  %v843 = vand.u32 %v842, 7
  %v844 = vcvt.s32.f32 %v843
  %v845 = vshra.s32 %v842, 3
  %v846 = vand.u32 %v845, 7
  %v847 = vcvt.s32.f32 %v846
  %v848 = vsub.f32 0.0, %v801
  %v849 = vmul.f32 %v848, 1.442695
  %v850 = vpow.pop %v849
  %v851 = vadd.f32 %v850, 1.0
  %v852 = vrcp.pop %v851
  %v853 = vadd.f32 %v852, %v844
  %v854 = vmul.f32 %v853, 2.0
  %v855 = vsub.f32 0.0, %v804
  %v856 = vmul.f32 %v855, 1.442695
  %v857 = vpow.pop %v856
  %v858 = vadd.f32 %v857, 1.0
  %v859 = vrcp.pop %v858
  %v860 = vadd.f32 %v859, %v847
  %v861 = vmul.f32 %v860, 2.0
  %v862 = vmul.f32 %v809, 1.442695
  %v863 = vpow.pop %v862
  %v864 = vld [vmem:[%s6] sm:$0xff]
  %866 = vset.pattern.permute.xlu0 0
  %867 = vperm.xlu0 %866, %v864
  %v868 = vpop.permute.xlu0 %867
  %v870 = vmul.f32 %v863, %v868
  %v871 = vmul.f32 %v812, 1.442695
  %v872 = vpow.pop %v871
  %v873 = vld [vmem:[%s7] sm:$0xff]
  %875 = vset.pattern.permute.xlu0 0
  %876 = vperm.xlu0 %875, %v873
  %v877 = vpop.permute.xlu0 %876
  %v879 = vmul.f32 %v872, %v877
  %v880 = vsub.f32 0.0, %v817
  %v881 = vsub.f32 0.0, %v820
  %v882 = vsub.f32 0.0, %v825
  %v883 = vsub.f32 0.0, %v828
  %v884 = vsub.f32 0.0, %v833
  %v885 = vmul.f32 %v880, 1.442695
  %v886 = vpow.pop %v885
  %v887 = vmul.f32 %v881, 1.442695
  %v888 = vpow.pop %v887
  %v889 = vmul.f32 %v882, 1.442695
  %v890 = vpow.pop %v889
  %v891 = vmul.f32 %v883, 1.442695
  %v892 = vpow.pop %v891
  %v893 = vmul.f32 %v884, 1.442695
  %v894 = vpow.pop %v893
  %v895 = vadd.f32 %v886, 1.0
  %v896 = vadd.f32 %v888, 1.0
  %v897 = vadd.f32 %v890, 1.0
  %v898 = vadd.f32 %v892, 1.0
  %v899 = vadd.f32 %v894, 1.0
  %v900 = vrcp.pop %v895
  %v901 = vrcp.pop %v896
  %v902 = vrcp.pop %v897
  %v903 = vrcp.pop %v898
  %v904 = vrcp.pop %v899
  %905 = vst [vmem:[%s8] sm:$0xff] %v854
  %906 = vst [vmem:[%s8 + $0x8] sm:$0xff] %v861
  %907 = vst [vmem:[%s8 + $0x10] sm:$0xff] %v870
  %908 = vst [vmem:[%s8 + $0x18] sm:$0xff] %v879
  %909 = vst [vmem:[%s8 + $0x20] sm:$0xff] %v900
  %910 = vst [vmem:[%s8 + $0x28] sm:$0xff] %v901
  %911 = vst [vmem:[%s8 + $0x30] sm:$0xff] %v902
  %912 = vst [vmem:[%s8 + $0x38] sm:$0xff] %v903
  %913 = vst [vmem:[%s8 + $0x40] sm:$0xff] %v904
  // Predicated region
  $region34: #{_fused_forward.1} parent=0 // pred_check
    _
  $region35: #{_fused_forward.1} parent=0 // pred_check_branch
    %915 = sbr.rel (0) target = $region37
  $region36: #{_fused_forward.1} parent=0 // pred_region
    _
  $region37: #{_fused_forward.1} parent=0 // pred_fallthru
    _
  // Predicated region
  $region38: #{_fused_forward.1} parent=0 // pred_check
    _
  $region39: #{_fused_forward.1} parent=0 // pred_check_branch
    %917 = sbr.rel (0) target = $region41
  $region40: #{_fused_forward.1} parent=0 // pred_region
    _
  $region41: #{_fused_forward.1} parent=0 // pred_fallthru
    _

</llo_original>
